<compile_context>
chip_gen: v6e
topology: v6e:2x2x1
jax: 0.10.0
libtpu: 0.0.40
codegen_flags: <defaults>
</compile_context>

<pallas_src>
import jax
import jax.numpy as jnp
from jax import lax
from jax.experimental import pallas as pl
from jax.experimental.pallas import tpu as pltpu


# --------------------------- VMEM budget helpers ----------------------------


def _vmem_budget_bytes():
    """~75% of physical VMEM: ~48 MiB on v7x, ~96 MiB on v5e/v6e."""
    cap = 64 * 1024 * 1024  # conservative default (v7x per-TensorCore)
    try:
        info = pltpu.get_tpu_info()
        cap = int(getattr(info, "vmem_capacity_bytes", cap))
    except Exception:
        pass
    return int(cap * 3 // 4)


def _round_up(x, m):
    return (x + m - 1) // m * m


def _pick_hw_tile(hw_padded, c, budget):
    """Largest HW tile dividing hw_padded whose phase-2 footprint fits budget."""
    for t in (4096, 2048, 1024, 512, 256, 128):
        if hw_padded % t == 0 and (24 * c * t + 8 * c * c) <= budget:
            return t
    return 128  # hw_padded is always a multiple of 128 by construction


# ------------------------- Fused kernel (grid = (B,)) -----------------------


def _cam_fused_kernel(gamma_ref, x_ref, o_ref):
    """gamma: SMEM (1,); x_ref/o_ref: (1, C, HW) per-batch slab in VMEM."""
    x = x_ref[0]                                           # (C, HW)
    xb = x.astype(jnp.bfloat16)
    # energy = X @ X^T: contract the last dim of both operands (MXU-native NT
    # form, no (C, HW) transpose materialized).
    energy = lax.dot_general(
        xb, xb, dimension_numbers=(((1,), (1,)), ((), ())),
        preferred_element_type=jnp.float32)                # (C, C) f32
    # softmax(rowmax(E) - E) == softmax(-E); shift by rowmin(E) for stability
    # (shift-invariant, exponent args <= 0, single cross-lane reduction).
    e = jnp.exp(jnp.min(energy, axis=-1, keepdims=True) - energy)
    inv = pl.reciprocal(jnp.sum(e, axis=-1, keepdims=True), approx=True)
    # Fold gamma into the attention matrix and keep it bf16 for the MXU.
    attn_g = (gamma_ref[0] * (e * inv)).astype(jnp.bfloat16)
    out = lax.dot_general(
        attn_g, xb, dimension_numbers=(((1,), (0,)), ((), ())),
        preferred_element_type=jnp.float32)                # (C, HW) f32
    o_ref[0] = (out + x.astype(jnp.float32)).astype(o_ref.dtype)


# -------------- Two-pass streaming path (large C*HW fallback) ---------------


def _cam_attention_kernel(gamma_ref, x_ref, attn_ref, energy_acc):
    """Phase 1: accumulate energy over HW tiles; emit gamma-folded bf16 attn."""
    j = pl.program_id(1)

    @pl.when(j == 0)
    def _():
        energy_acc[...] = jnp.zeros_like(energy_acc)

    x_tile = x_ref[0].astype(jnp.bfloat16)                 # (C, tk)
    energy_acc[...] += lax.dot_general(
        x_tile, x_tile, dimension_numbers=(((1,), (1,)), ((), ())),
        preferred_element_type=jnp.float32)

    @pl.when(j == pl.num_programs(1) - 1)
    def _():
        energy = energy_acc[...]                           # (C, C)
        e = jnp.exp(jnp.min(energy, axis=-1, keepdims=True) - energy)
        inv = pl.reciprocal(jnp.sum(e, axis=-1, keepdims=True), approx=True)
        # gamma folded + single bf16 cast here (phase 2 never recasts it).
        attn_ref[0] = (gamma_ref[0] * (e * inv)).astype(attn_ref.dtype)


def _cam_apply_kernel(attn_ref, x_ref, o_ref):
    """Phase 2: out tile = attn_g @ x tile + x tile."""
    attn_g = attn_ref[0]                                   # (C, C) bf16, resident
    x = x_ref[0]                                           # (C, tk)
    out = lax.dot_general(
        attn_g, x.astype(jnp.bfloat16),
        dimension_numbers=(((1,), (0,)), ((), ())),
        preferred_element_type=jnp.float32)                # (C, tk) f32
    o_ref[0] = (out + x.astype(jnp.float32)).astype(o_ref.dtype)


# -------------------------------- Wrapper -----------------------------------


def channel_attention_module(x, gamma, force_two_pass=False):
    """x: (B, C, H, W); gamma: (1,) f32 scalar parameter (Scale(scale=0))."""
    B, C, H, W = x.shape
    HW = H * W
    HWp = HW if HW % 128 == 0 else _round_up(HW, 128)
    budget = _vmem_budget_bytes()

    gamma = jnp.asarray(gamma, dtype=jnp.float32).reshape((1,))

    x_flat = x.reshape(B, C, HW)
    if HWp != HW:
        # Zero columns contribute 0 to energy and 0 to out; cropped at the end.
        x_flat = jnp.pad(x_flat, ((0, 0), (0, 0), (0, HWp - HW)))

    smem_spec = pl.BlockSpec(memory_space=pltpu.MemorySpace.SMEM)

    fused_bytes = 22 * C * HWp + 16 * C * C
    use_fused = (not force_two_pass) and (fused_bytes <= budget)

    if use_fused:
        # Single HBM read + write of X per batch element.
        out_flat = pl.pallas_call(
            _cam_fused_kernel,
            out_shape=jax.ShapeDtypeStruct((B, C, HWp), x.dtype),
            grid_spec=pltpu.PrefetchScalarGridSpec(
                num_scalar_prefetch=0,
                grid=(B,),
                in_specs=[
                    smem_spec,                                      # gamma
                    pl.BlockSpec((1, C, HWp), lambda b: (b, 0, 0)),  # x slab
                ],
                out_specs=pl.BlockSpec((1, C, HWp), lambda b: (b, 0, 0)),
            ),
            compiler_params=pltpu.CompilerParams(
                dimension_semantics=("parallel",),
                vmem_limit_bytes=budget),
        )(gamma, x_flat)
    else:
        tk = _pick_hw_tile(HWp, C, budget)
        n_hw = HWp // tk

        # Phase 1: per-batch gamma-folded bf16 attention matrix.
        attn = pl.pallas_call(
            _cam_attention_kernel,
            out_shape=jax.ShapeDtypeStruct((B, C, C), jnp.bfloat16),
            grid_spec=pltpu.PrefetchScalarGridSpec(
                num_scalar_prefetch=0,
                grid=(B, n_hw),
                in_specs=[
                    smem_spec,                                          # gamma
                    pl.BlockSpec((1, C, tk), lambda b, j: (b, 0, j)),   # x tile
                ],
                out_specs=pl.BlockSpec((1, C, C), lambda b, j: (b, 0, 0)),
                scratch_shapes=[pltpu.VMEM((C, C), jnp.float32)],
            ),
            compiler_params=pltpu.CompilerParams(
                dimension_semantics=("parallel", "arbitrary"),
                vmem_limit_bytes=budget),
        )(gamma, x_flat)

        # Phase 2: stream X again; both grid axes independent.
        out_flat = pl.pallas_call(
            _cam_apply_kernel,
            out_shape=jax.ShapeDtypeStruct((B, C, HWp), x.dtype),
            grid_spec=pltpu.PrefetchScalarGridSpec(
                num_scalar_prefetch=0,
                grid=(B, n_hw),
                in_specs=[
                    pl.BlockSpec((1, C, C), lambda b, j: (b, 0, 0)),    # attn_g
                    pl.BlockSpec((1, C, tk), lambda b, j: (b, 0, j)),   # x tile
                ],
                out_specs=pl.BlockSpec((1, C, tk), lambda b, j: (b, 0, j)),
            ),
            compiler_params=pltpu.CompilerParams(
                dimension_semantics=("parallel", "parallel"),
                vmem_limit_bytes=budget),
        )(attn, x_flat)

    if HWp != HW:
        out_flat = out_flat[:, :, :HW]
    return out_flat.reshape(B, C, H, W)


# ------------------------------- References ---------------------------------


def channel_attention_ref(x, gamma):
    """Pure f32 reference matching the PyTorch module."""
    B, C, H, W = x.shape
    q = x.reshape(B, C, -1)
    energy = jnp.einsum("bcx,bdx->bcd", q, q)
    energy_new = jnp.max(energy, axis=-1, keepdims=True) - energy
    attn = jax.nn.softmax(energy_new, axis=-1)
    out = jnp.einsum("bcd,bdx->bcx", attn, q).reshape(B, C, H, W)
    return gamma[0] * out + x


def channel_attention_ref_bf16(x, gamma):
    """Reference mirroring the kernel's bf16-input / f32-accumulate matmuls."""
    B, C, H, W = x.shape
    q = x.reshape(B, C, -1)
    qb = q.astype(jnp.bfloat16)
    energy = jnp.einsum("bcx,bdx->bcd", qb, qb,
                        preferred_element_type=jnp.float32)
    energy_new = jnp.max(energy, axis=-1, keepdims=True) - energy
    attn = jax.nn.softmax(energy_new, axis=-1)
    out = jnp.einsum("bcd,bdx->bcx", attn.astype(jnp.bfloat16), qb,
                     preferred_element_type=jnp.float32).reshape(B, C, H, W)
    return gamma[0] * out + x


if __name__ == "__main__":
    key = jax.random.PRNGKey(0)
    B, C, H, W = 2, 4, 16, 16
    x = jax.random.normal(key, (B, C, H, W), dtype=jnp.float32)

    # Scale(scale=0) -> learnable scalar gamma initialized to 0 (deterministic).
    gamma0 = jnp.zeros((1,), dtype=jnp.float32)
    out0 = jax.block_until_ready(channel_attention_module(x, gamma0))
    assert out0.shape == (B, C, H, W)
    # With gamma == 0 the module output is exactly the residual input
    # (gamma is folded into attn, so attn_g == 0 and out == x exactly).
    assert jnp.allclose(out0, x, atol=1e-6, rtol=1e-6)

    # Nonzero gamma exercises the full attention path (fused kernel).
    gamma1 = jnp.array([0.5], dtype=jnp.float32)
    out1 = jax.block_until_ready(channel_attention_module(x, gamma1))
    ref_bf16 = channel_attention_ref_bf16(x, gamma1)
    ref_f32 = channel_attention_ref(x, gamma1)
    # Tight check vs a reference with matching bf16 matmul rounding.
    assert jnp.allclose(out1, ref_bf16, atol=1e-2, rtol=1e-2)
    # Coarse sanity check vs the pure f32 reference (bf16 MXU deviation).
    assert jnp.allclose(out1, ref_f32, atol=5e-2, rtol=5e-2)

    # Also exercise the two-pass streaming fallback (used for large C*HW).
    out2 = jax.block_until_ready(
        channel_attention_module(x, gamma1, force_two_pass=True))
    assert jnp.allclose(out2, ref_bf16, atol=1e-2, rtol=1e-2)
    assert jnp.allclose(out2, ref_f32, atol=5e-2, rtol=5e-2)

    print("KERNEL_OK")
</pallas_src>

<mosaic_0001>
module attributes {stable_mosaic.version = 11 : i64} {
  func.func @_cam_fused_kernel(%arg0: i32, %arg1: memref<1xf32, #tpu.memory_space<smem>>, %arg2: memref<1x4x256xf32, #tpu.memory_space<vmem>>, %arg3: memref<1x4x256xf32, #tpu.memory_space<vmem>>) attributes {dimension_semantics = [#tpu.dimension_semantics<parallel>], iteration_bounds = array<i64: 2>, scalar_prefetch = 0 : i64, scratch_operands = 0 : i64, tpu.core_type = #tpu.core_type<tc>, window_params = [{transform_indices = @transform_0, window_bounds = array<i64: 1>}, {transform_indices = @transform_1, window_bounds = array<i64: 1, 4, 256>}, {transform_indices = @transform_2, window_bounds = array<i64: 1, 4, 256>}]} {
    %c0 = arith.constant 0 : index
    %c0_0 = arith.constant 0 : index
    %c0_1 = arith.constant 0 : index
    %0 = vector.load %arg2[%c0, %c0_0, %c0_1] : memref<1x4x256xf32, #tpu.memory_space<vmem>>, vector<1x4x256xf32>
    %1 = vector.shape_cast %0 : vector<1x4x256xf32> to vector<4x256xf32>
    %2 = arith.truncf %1 : vector<4x256xf32> to vector<4x256xbf16>
    %cst = arith.constant dense<0.000000e+00> : vector<4x4xf32>
    %3 = tpu.matmul %2, %2, %cst {dimension_numbers = #tpu.dot_dimension_numbers<[1], [1], [0], [0], [0, 0, 1, 0], [], []>} : vector<4x256xbf16>, vector<4x256xbf16>, vector<4x4xf32> -> vector<4x4xf32>
    %cst_2 = arith.constant dense<0x7F800000> : vector<4xf32>
    %4 = vector.multi_reduction <minimumf>, %3, %cst_2 [1] : vector<4x4xf32> to vector<4xf32>
    %5 = vector.shape_cast %4 : vector<4xf32> to vector<4x1xf32>
    %6 = vector.broadcast %5 : vector<4x1xf32> to vector<4x4xf32>
    %7 = arith.subf %6, %3 : vector<4x4xf32>
    %8 = math.exp %7 : vector<4x4xf32>
    %cst_3 = arith.constant dense<0.000000e+00> : vector<4xf32>
    %9 = vector.multi_reduction <add>, %8, %cst_3 [1] : vector<4x4xf32> to vector<4xf32>
    %10 = vector.shape_cast %9 : vector<4xf32> to vector<4x1xf32>
    %11 = tpu.reciprocal %10 {approx = true} : vector<4x1xf32> -> vector<4x1xf32>
    %c0_4 = arith.constant 0 : index
    %12 = memref.load %arg1[%c0_4] : memref<1xf32, #tpu.memory_space<smem>>
    %13 = vector.broadcast %11 : vector<4x1xf32> to vector<4x4xf32>
    %14 = arith.mulf %8, %13 : vector<4x4xf32>
    %15 = vector.broadcast %12 : f32 to vector<4x4xf32>
    %16 = arith.mulf %15, %14 : vector<4x4xf32>
    %17 = arith.truncf %16 : vector<4x4xf32> to vector<4x4xbf16>
    %cst_5 = arith.constant dense<0.000000e+00> : vector<4x256xf32>
    %18 = tpu.matmul %17, %2, %cst_5 {dimension_numbers = #tpu.dot_dimension_numbers<[1], [0], [0], [1], [0, 0, 1, 1], [], []>} : vector<4x4xbf16>, vector<4x256xbf16>, vector<4x256xf32> -> vector<4x256xf32>
    %19 = arith.addf %18, %1 : vector<4x256xf32>
    %c0_6 = arith.constant 0 : index
    %c0_7 = arith.constant 0 : index
    %c0_8 = arith.constant 0 : index
    %20 = vector.load %arg3[%c0_6, %c0_7, %c0_8] : memref<1x4x256xf32, #tpu.memory_space<vmem>>, vector<1x4x256xf32>
    %21 = vector.shape_cast %20 : vector<1x4x256xf32> to vector<4x256xf32>
    %22 = vector.shape_cast %19 : vector<4x256xf32> to vector<1x4x256xf32>
    tpu.vector_store %arg3[%c0_6, %c0_7, %c0_8], %22 {strides = array<i32>} : memref<1x4x256xf32, #tpu.memory_space<vmem>>, vector<1x4x256xf32>,
    return
  }
  func.func @transform_0(%arg0: i32) -> i32 {
    %c0_i32 = arith.constant 0 : i32
    %c0_i32_0 = arith.constant 0 : i32
    return %c0_i32 : i32
  }
  func.func @transform_1(%arg0: i32) -> (i32, i32, i32) {
    %c0_i32 = arith.constant 0 : i32
    %c0_i32_0 = arith.constant 0 : i32
    %c0_i32_1 = arith.constant 0 : i32
    return %arg0, %c0_i32, %c0_i32_0 : i32, i32, i32
  }
  func.func @transform_2(%arg0: i32) -> (i32, i32, i32) {
    %c0_i32 = arith.constant 0 : i32
    %c0_i32_0 = arith.constant 0 : i32
    %c0_i32_1 = arith.constant 0 : i32
    return %arg0, %c0_i32, %c0_i32_0 : i32, i32, i32
  }
}

</mosaic_0001>

<llo_original>
// kernel: tpu_custom_call.1
$region0: #{tpu_custom_call.1}
  #allocation0 [shape = 'u32[]', space=smem, size = 0x4, offset = 0x4, fixed_abs, tag = 'smem constant byte address 0x4 - core index']
  #allocation1 [shape = 'u32[144,128]{1,0:T(1,128)}', space=vmem, size = 0x12000, scoped, tag = 'internal scratch']
  #allocation2 [shape = 'f32[1]{0:T(128)S(6)}', space=smem, size = 0x200, scoped, tag = 'scoped memory for tpu_custom_call.1']
  %s0 = inlined_call_operand.<no memory space> [shape: f32[1], index: 0, kind: input, shape index: {}]
  %s1 = inlined_call_operand.hbm [shape: f32[2,4,256], index: 1, kind: input, shape index: {}]
  %s2 = inlined_call_operand.hbm [shape: f32[2,4,256], index: 2, kind: output, shape index: {}]
  %s3 = sld [smem:[#allocation0]]
  $region45: #{tpu_custom_call.1} parent=0
    _
  %s5 = ssub.s32 1, %s3
  %s6 = scalar_select 0, %s5, %s3
  %7 = sst [smem:[#allocation2]] %s0
  $region1: #{tpu_custom_call.1} parent=0
    #allocation3 [shape = 'u8[8192]{0}', space=vmem, size = 0x2000, scoped, tag = 'input window, operand 1']
    #allocation4 [shape = 's32[2]{0}', space=sflag, size = 0x8, scoped, tag = 'scoped memory for tpu_custom_call.1']
    #allocation5 [shape = 's32[2]{0}', space=sflag, size = 0x8, scoped, tag = 'scoped memory for tpu_custom_call.1']
    #allocation6 [shape = 'u8[8192]{0}', space=vmem, size = 0x2000, scoped, tag = 'output window, operand 0']
    %8 = vsyncpa [#allocation4], 0
    %s9 = scalar_lea.sflag [#allocation4], 1
    %10 = vsyncpa %s9, 0
    %11 = vsyncpa [#allocation5], 0
    %s12 = scalar_lea.sflag [#allocation5], 1
    %13 = vsyncpa %s12, 0
    loop: start=0, step=1, limit=4
    $region2: #{tpu_custom_call.1} parent=1 // loop_pre_header
      _
    $region3: #{tpu_custom_call.1} parent=1 // loop_header
      %s15 = sphi 0, %s19
      %p16 = scmp.ge.s32.totalorder %s15, 4
      %s23 = sphi 0, %s23
      %s25 = sphi 0, %s23
      %s26 = sphi 0, %s25
      %s40 = sphi 0, %s26
      %s46 = sphi 0, %s48
      %s49 = sphi 0, %s46
      %s50 = sphi 0, %s49
      %s66 = sphi 0, %s50
      %s72 = sphi 0, %s74
      %s75 = sphi 0, %s72
      %s76 = sphi 0, %s75
      %s92 = sphi 0, %s76
    $region4: #{tpu_custom_call.1} parent=1 // loop_header_branch
      %18 = sbr.rel (%p16) target = $region8
    $region5: #{tpu_custom_call.1} parent=1 // loop_body
      %s20 = ssub.s32 %s15, 1
      %s21 = ssub.s32 %s15, 2
      %s22 = sadd.s32 %s15, 1
      %s24 = sadd.s32 %s23, 1
      %p27 = scmp.eq.s32.totalorder %s15, 1
      %p28 = scmp.ne.s32.totalorder %s23, %s25
      %p29 = scmp.eq.s32.totalorder %s15, 0
      %p30 = por %p28, %p29
      %p31 = scmp.ne.s32.totalorder %s23, %s25
      %p32 = scmp.eq.s32.totalorder %s20, 1
      %p33 = por %p31, %p32
      %p34 = scmp.ne.s32.totalorder %s25, %s26
      %p35 = scmp.eq.s32.totalorder %s20, 0
      %p36 = por %p34, %p35
      %p37 = scmp.ne.s32.totalorder %s25, %s26
      %p38 = scmp.eq.s32.totalorder %s21, 1
      %p39 = por %p37, %p38
      %p41 = scmp.ne.s32.totalorder %s26, %s40
      %p42 = scmp.eq.s32.totalorder %s21, 0
      %p43 = por %p41, %p42
      %s44 = ssub.s32 %s15, %s22
      %p45 = scmp.eq.s32.totalorder %s44, 0
      %s47 = sadd.s32 %s46, 1
      %s48 = scalar_select %p45, %s46, %s47
      %p51 = pneg %p45
      %p52 = scmp.eq.s32.totalorder %s15, 1
      %p53 = por %p51, %p52
      %p54 = scmp.ne.s32.totalorder %s46, %s49
      %p55 = scmp.eq.s32.totalorder %s15, 0
      %p56 = por %p54, %p55
      %p57 = scmp.ne.s32.totalorder %s46, %s49
      %p58 = scmp.eq.s32.totalorder %s20, 1
      %p59 = por %p57, %p58
      %p60 = scmp.ne.s32.totalorder %s49, %s50
      %p61 = scmp.eq.s32.totalorder %s20, 0
      %p62 = por %p60, %p61
      %p63 = scmp.ne.s32.totalorder %s49, %s50
      %p64 = scmp.eq.s32.totalorder %s21, 1
      %p65 = por %p63, %p64
      %p67 = scmp.ne.s32.totalorder %s50, %s66
      %p68 = scmp.eq.s32.totalorder %s21, 0
      %p69 = por %p67, %p68
      %s70 = ssub.s32 %s15, %s22
      %p71 = scmp.eq.s32.totalorder %s70, 0
      %s73 = sadd.s32 %s72, 1
      %s74 = scalar_select %p71, %s72, %s73
      %p77 = pneg %p71
      %p78 = scmp.eq.s32.totalorder %s15, 1
      %p79 = por %p77, %p78
      %p80 = scmp.ne.s32.totalorder %s72, %s75
      %p81 = scmp.eq.s32.totalorder %s15, 0
      %p82 = por %p80, %p81
      %p83 = scmp.ne.s32.totalorder %s72, %s75
      %p84 = scmp.eq.s32.totalorder %s20, 1
      %p85 = por %p83, %p84
      %p86 = scmp.ne.s32.totalorder %s75, %s76
      %p87 = scmp.eq.s32.totalorder %s20, 0
      %p88 = por %p86, %p87
      %p89 = scmp.ne.s32.totalorder %s75, %s76
      %p90 = scmp.eq.s32.totalorder %s21, 1
      %p91 = por %p89, %p90
      %p93 = scmp.ne.s32.totalorder %s76, %s92
      %p94 = scmp.eq.s32.totalorder %s21, 0
      %p95 = por %p93, %p94
      %p96 = scmp.le.s32.totalorder 1, %s15
      %p97 = scmp.lt.s32.totalorder %s15, 3
      %p98 = pnand %p96, %p97
      %p99 = pneg %p98
      // Predicated region
      $region9: #{tpu_custom_call.1} parent=5 // pred_check
        _
      $region10: #{tpu_custom_call.1} parent=5 // pred_check_branch
        %101 = sbr.rel (%p98) target = $region12
      $region11: #{tpu_custom_call.1} parent=5 // pred_region
        %s102 = ssub.s32 %s15, 1
        // Predicated region
        $region13: #{tpu_custom_call.1} parent=11 // pred_check
          %p103 = pneg %p36
        $region14: #{tpu_custom_call.1} parent=11 // pred_check_branch
          %105 = sbr.rel (%p103) target = $region16
        $region15: #{tpu_custom_call.1} parent=11 // pred_region
          _
        $region16: #{tpu_custom_call.1} parent=11 // pred_fallthru
          _
      $region12: #{tpu_custom_call.1} parent=5 // pred_fallthru
        _
      %p106 = scmp.lt.s32.totalorder %s15, 2
      // Predicated region
      $region17: #{tpu_custom_call.1} parent=5 // pred_check
        %p107 = pneg %p106
      $region18: #{tpu_custom_call.1} parent=5 // pred_check_branch
        %109 = sbr.rel (%p107) target = $region20
      $region19: #{tpu_custom_call.1} parent=5 // pred_region
        // Predicated region
        $region21: #{tpu_custom_call.1} parent=19 // pred_check
          %p110 = pneg %p56
        $region22: #{tpu_custom_call.1} parent=19 // pred_check_branch
          %112 = sbr.rel (%p110) target = $region24
        $region23: #{tpu_custom_call.1} parent=19 // pred_region
          %s113 = sand.u32 %s46, 1
          %s114 = scalar_lea.sflag [#allocation4], %s113
          %s115 = sand.u32 %s46, 1
          %s116 = smul.addr %s115, 8
          %s117 = scalar_lea.vmem [#allocation3], %s116
          %s119 = ssub.s32 128, 128
          %120 = vsyncadd %s114, %s119
          %s121 = smul.addr %s15, 2
          %s122 = smul.addr %s121, 64
          %s123 = scalar_lea.hbm %s1, %s122
          %s125 = sshll.u32 %s117, 4
          %s126 = int_to_ptr.vmem [resolvable:$true] %s125
          %128 = dma.hbm_to_vmem [thread:$0]  %s123, 128, %s126, %s114
        $region24: #{tpu_custom_call.1} parent=19 // pred_fallthru
          _
      $region20: #{tpu_custom_call.1} parent=5 // pred_fallthru
        _
      %p129 = scmp.le.s32.totalorder 1, %s15
      %p130 = scmp.lt.s32.totalorder %s15, 3
      %p131 = pnand %p129, %p130
      %p132 = pneg %p131
      // Predicated region
      $region25: #{tpu_custom_call.1} parent=5 // pred_check
        _
      $region26: #{tpu_custom_call.1} parent=5 // pred_check_branch
        %134 = sbr.rel (%p131) target = $region28
      $region27: #{tpu_custom_call.1} parent=5 // pred_region
        %s135 = ssub.s32 %s15, 1
        %s136 = sand.u32 %s49, 1
        %s137 = scalar_lea.sflag [#allocation4], %s136
        %s138 = sand.u32 %s49, 1
        %s139 = smul.addr %s138, 8
        %s140 = scalar_lea.vmem [#allocation3], %s139
        // Predicated region
        $region29: #{tpu_custom_call.1} parent=27 // pred_check
          %p141 = pneg %p62
        $region30: #{tpu_custom_call.1} parent=27 // pred_check_branch
          %143 = sbr.rel (%p141) target = $region32
        $region31: #{tpu_custom_call.1} parent=27 // pred_region
          %144 = dma.done %s137, 128
        $region32: #{tpu_custom_call.1} parent=27 // pred_fallthru
          _
        %p145 = pneg %p36
        %p146 = pneg %p33
        %s147 = sand.u32 %s49, 1
        %s148 = scalar_lea.sflag [#allocation4], %s147
        %s149 = sand.u32 %s49, 1
        %s150 = smul.addr %s149, 8
        %s151 = scalar_lea.vmem [#allocation3], %s150
        %p152 = pneg %p62
        %p153 = pneg %p59
        %p154 = pneg %p88
        %p155 = pneg %p85
        %s156 = sand.u32 %s75, 1
        %s157 = scalar_lea.sflag [#allocation5], %s156
        %s158 = sand.u32 %s75, 1
        %s159 = smul.addr %s158, 8
        %s160 = scalar_lea.vmem [#allocation6], %s159
        %v162 = vld [vmem:[%s140] sm:$0xff]
        %v164 = vcombine.high %v162, %v162
        %v166 = vpack.c.bf16 %v162, %v162
        %v167 = vpack.c.bf16 %v164, %v164
        %168 = vmatprep.subr.bf16.mxu0 0
        %169 = vmatpush1.bf16.xpose.msra.mxu0 0
        %170 = vmatprep.subr.bf16.mxu0 0
        %171 = vmatpush1.bf16.xpose.msra.mxu0 0
        %172 = vmatprep.subr.bf16.mxu0 0
        %173 = vmatpush1.bf16.xpose.msra.mxu0 0
        %174 = vmatprep.subr.bf16.mxu0 0
        %175 = vmatpush1.bf16.xpose.msra.mxu0 0
        %176 = vmatprep.subr.bf16.mxu0 0
        %177 = vmatpush1.bf16.xpose.msra.mxu0 0
        %178 = vmatprep.subr.bf16.mxu0 0
        %179 = vmatpush1.bf16.xpose.msra.mxu0 0
        %180 = vmatprep.subr.bf16.mxu0 0
        %181 = vmatpush1.bf16.xpose.msra.mxu0 0
        %182 = vmatprep.subr.bf16.mxu0 %v167
        %183 = vmatpush1.bf16.xpose.msra.mxu0 %v166
        %184 = vmatprep.subr.bf16.mxu0 0
        %185 = vmatpush2.bf16.xpose.msra.mxu0 0
        %186 = vmatprep.subr.bf16.mxu0 0
        %187 = vmatpush2.bf16.xpose.msra.mxu0 0
        %188 = vmatprep.subr.bf16.mxu0 0
        %189 = vmatpush2.bf16.xpose.msra.mxu0 0
        %190 = vmatprep.subr.bf16.mxu0 0
        %191 = vmatpush2.bf16.xpose.msra.mxu0 0
        %192 = vmatprep.subr.bf16.mxu0 0
        %193 = vmatpush2.bf16.xpose.msra.mxu0 0
        %194 = vmatprep.subr.bf16.mxu0 0
        %195 = vmatpush2.bf16.xpose.msra.mxu0 0
        %196 = vmatprep.subr.bf16.mxu0 0
        %197 = vmatpush2.bf16.xpose.msra.mxu0 0
        %198 = vmatprep.subr.bf16.mxu0 0
        %199 = vmatpush2.bf16.xpose.msra.mxu0 0
        %200 = vmatprep.mubr.bf16.mxu0 %v167
        %201 = vmatmul.mubr.bf16.gmra.mxu0 %v166
        %v202 = vpop.f32.mrf.mxu0
        %v203 = vadd.f32 0.0, %v202
        %v204 = vpop.f32.mrf.mxu0
        %v205 = vpop.f32.mrf.mxu0
        %v206 = vpop.f32.mrf.mxu0
        %207 = vdwg.mxu0
        %vm208 = vcmask 27648
        %v209 = vsel %vm208, %v203, inf
        %210 = vmin.xlane.f32.xlu0 %v209
        %v211 = vpop.xlane.xlu0 %210
        %v212 = vsub.f32 %v211, %v203
        %v213 = vmul.f32 %v212, 1.442695
        %v214 = vpow.pop %v213
        %v215 = vsel %vm208, %v214, 0.0
        %216 = vadd.xlane.f32.xlu0 %v215
        %v217 = vpop.xlane.xlu0 %216
        %v218 = vrcp.pop %v217
        %s219 = sld [smem:[#allocation2]]
        %v220 = vmul.f32 %v214, %v218
        %v221 = vstv %s219
        %v222 = vmul.f32 %v221, %v220
        %v223 = vpack.c.bf16 %v222, %v222
        %vm224 = vcmask 31744
        %v226 = vsel %vm224, %v223, 0
        %vm228 = vcmask 1041408
        %v230 = vsel %vm228, %v166, 0
        %v233 = vsel %vm228, %v167, 0
        %235 = vmatprep.subr.bf16.mxu0 0
        %236 = vmatpush1.bf16.msra.mxu0 0
        %237 = vmatprep.subr.bf16.mxu0 0
        %238 = vmatpush1.bf16.msra.mxu0 0
        %239 = vmatprep.subr.bf16.mxu0 0
        %240 = vmatpush1.bf16.msra.mxu0 0
        %241 = vmatprep.subr.bf16.mxu0 0
        %242 = vmatpush1.bf16.msra.mxu0 0
        %243 = vmatprep.subr.bf16.mxu0 0
        %244 = vmatpush1.bf16.msra.mxu0 0
        %245 = vmatprep.subr.bf16.mxu0 0
        %246 = vmatpush1.bf16.msra.mxu0 0
        %247 = vmatprep.subr.bf16.mxu0 0
        %248 = vmatpush1.bf16.msra.mxu0 0
        %249 = vmatprep.subr.bf16.mxu0 %v233
        %250 = vmatpush1.bf16.msra.mxu0 %v230
        %251 = vmatprep.subr.bf16.mxu0 0
        %252 = vmatpush2.bf16.msra.mxu0 0
        %253 = vmatprep.subr.bf16.mxu0 0
        %254 = vmatpush2.bf16.msra.mxu0 0
        %255 = vmatprep.subr.bf16.mxu0 0
        %256 = vmatpush2.bf16.msra.mxu0 0
        %257 = vmatprep.subr.bf16.mxu0 0
        %258 = vmatpush2.bf16.msra.mxu0 0
        %259 = vmatprep.subr.bf16.mxu0 0
        %260 = vmatpush2.bf16.msra.mxu0 0
        %261 = vmatprep.subr.bf16.mxu0 0
        %262 = vmatpush2.bf16.msra.mxu0 0
        %263 = vmatprep.subr.bf16.mxu0 0
        %264 = vmatpush2.bf16.msra.mxu0 0
        %265 = vmatprep.subr.bf16.mxu0 0
        %266 = vmatpush2.bf16.msra.mxu0 0
        %267 = vmatprep.mubr.bf16.mxu0 0
        %268 = vmatmul.mubr.bf16.gmra.mxu0 %v226
        %v269 = vpop.f32.mrf.mxu0
        %v270 = vadd.f32 %v162, %v269
        %v271 = vpop.f32.mrf.mxu0
        %v272 = vadd.f32 %v164, %v271
        %v273 = vpop.f32.mrf.mxu0
        %v274 = vpop.f32.mrf.mxu0
        %275 = vdwg.mxu0
        %v278 = vcombine.low %v270, %v272
        %280 = vst [vmem:[%s160] sm:$0xff] %v278
        %s281 = sand.u32 %s75, 1
        %s282 = scalar_lea.sflag [#allocation5], %s281
        %s283 = sand.u32 %s75, 1
        %s284 = smul.addr %s283, 8
        %s285 = scalar_lea.vmem [#allocation6], %s284
        // Predicated region
        $region33: #{tpu_custom_call.1} parent=27 // pred_check
          %p286 = pneg %p85
        $region34: #{tpu_custom_call.1} parent=27 // pred_check_branch
          %288 = sbr.rel (%p286) target = $region36
        $region35: #{tpu_custom_call.1} parent=27 // pred_region
          %s290 = ssub.s32 128, 128
          %291 = vsyncadd %s282, %s290
          %s292 = smul.addr %s20, 2
          %s293 = smul.addr %s292, 64
          %s294 = scalar_lea.hbm %s2, %s293
          %s296 = sshll.u32 %s285, 4
          %s297 = int_to_ptr.vmem [resolvable:$true] %s296
          %299 = dma.vmem_to_hbm [thread:$0]  %s297, 128, %s294, %s282
        $region36: #{tpu_custom_call.1} parent=27 // pred_fallthru
          _
      $region28: #{tpu_custom_call.1} parent=5 // pred_fallthru
        _
      %p300 = scmp.le.s32.totalorder 2, %s15
      // Predicated region
      $region37: #{tpu_custom_call.1} parent=5 // pred_check
        %p301 = pneg %p300
      $region38: #{tpu_custom_call.1} parent=5 // pred_check_branch
        %303 = sbr.rel (%p301) target = $region40
      $region39: #{tpu_custom_call.1} parent=5 // pred_region
        %s304 = ssub.s32 %s15, 2
        // Predicated region
        $region41: #{tpu_custom_call.1} parent=39 // pred_check
          %p305 = pneg %p91
        $region42: #{tpu_custom_call.1} parent=39 // pred_check_branch
          %307 = sbr.rel (%p305) target = $region44
        $region43: #{tpu_custom_call.1} parent=39 // pred_region
          %s308 = sand.u32 %s76, 1
          %s309 = scalar_lea.sflag [#allocation5], %s308
          %s310 = sand.u32 %s76, 1
          %s311 = smul.addr %s310, 8
          %s312 = scalar_lea.vmem [#allocation6], %s311
          %313 = dma.done %s309, 128
        $region44: #{tpu_custom_call.1} parent=39 // pred_fallthru
          _
      $region40: #{tpu_custom_call.1} parent=5 // pred_fallthru
        _
    $region6: #{tpu_custom_call.1} parent=1 // loop_footer
      %s19 = sadd.s32 1, %s15
    $region7: #{tpu_custom_call.1} parent=1 // loop_footer_branch
      %14 = sbr.rel target = $region3
    $region8: #{tpu_custom_call.1} parent=1 // loop_exit
      _
    %314 = vsyncpa [#allocation4], 1
    %s315 = scalar_lea.sflag [#allocation4], 1
    %316 = vsyncpa %s315, 1
    %317 = vsyncpa [#allocation5], 1
    %s318 = scalar_lea.sflag [#allocation5], 1
    %319 = vsyncpa %s318, 1

</llo_original>
